<compile_context>
chip_gen: v7x
topology: tpu7x:2x2x1
jax: 0.10.0
libtpu: 0.0.40
codegen_flags: <defaults>
</compile_context>

<pallas_src>
import functools

import jax
import jax.numpy as jnp
from jax import lax
from jax.experimental import pallas as pl
from jax.experimental.pallas import tpu as pltpu

LN_EPS = 1e-5  # nn.LayerNorm default


# -----------------------------------------------------------------------------
# Kernel: [LN(patch_dim) -> Linear -> LN(d_model)] on a tile of TN patches.
# Data arrives channel-major (C, TN, PL); the (l c) interleave, LN1 gamma and
# LN1 beta are pre-folded into w_ref / wsum_ref / be_ref by the wrapper, so
# the raw tile goes straight to the MXU.
# -----------------------------------------------------------------------------
def _patch_encoder_kernel(x_ref, w_ref, wsum_ref, be_ref, g2_ref, b2_ref, o_ref):
    # x_ref   : (C, TN, PL)   raw trace patches (un-normalized)
    # w_ref   : (C*PL, D)     LN1-gamma-scaled, channel-major-permuted weight
    # wsum_ref: (1, D)        column sums of w_ref   (for the algebraic fold)
    # be_ref  : (1, D)        linear bias + W @ ln1_beta
    # g2_ref, b2_ref : (1, D) LN2 affine
    # o_ref   : (TN, D)
    c_dim, _, pl_len = x_ref.shape
    inv_p = 1.0 / (c_dim * pl_len)

    # One lane-concatenated activation tile (TN, C*PL); its column order
    # (c*PL + l) matches the row order of w_ref, so a single K=C*PL MXU dot
    # replaces C separate K=PL dots.
    xcat = jnp.concatenate(
        [x_ref[c].astype(jnp.float32) for c in range(c_dim)], axis=-1)

    # LayerNorm(patch_dim) statistics — one pass (sum / sum-of-squares) in f32.
    mu = jnp.sum(xcat, axis=-1, keepdims=True) * inv_p            # (TN, 1)
    ex2 = jnp.sum(xcat * xcat, axis=-1, keepdims=True) * inv_p    # (TN, 1)
    var = jnp.maximum(ex2 - mu * mu, 0.0)                         # cancellation guard
    rstd = lax.rsqrt(var + LN_EPS)                                # (TN, 1)

    # Linear with LN1 folded in algebraically:
    #   y = rstd * (X @ Wk) - (mu * rstd) * colsum(Wk) + be
    raw = jnp.dot(xcat, w_ref[...], preferred_element_type=jnp.float32)  # (TN, D)
    y = raw * rstd - (mu * rstd) * wsum_ref[...] + be_ref[...]

    # LayerNorm(d_model) — fully lane-dense (D = 128).
    inv_d = 1.0 / y.shape[-1]
    mu2 = jnp.sum(y, axis=-1, keepdims=True) * inv_d
    ey2 = jnp.sum(y * y, axis=-1, keepdims=True) * inv_d
    var2 = jnp.maximum(ey2 - mu2 * mu2, 0.0)
    rstd2 = lax.rsqrt(var2 + LN_EPS)
    yn = (y - mu2) * rstd2
    o_ref[...] = (yn * g2_ref[...] + b2_ref[...]).astype(o_ref.dtype)


def _choose_tn(n, bb, tn_max):
    """Patches per grid step.

    Capped at tn_max to bound vreg pressure (no spills), multiple of 8 (or the
    full n).  If the total number of grid steps would be odd and n is big
    enough, split n so a 2-TensorCore chip (v7x) gets balanced work; the extra
    step only costs ~0.35 us on single-core chips (v5e/v6e)."""
    tn = n if n <= tn_max else max(8, (tn_max // 8) * 8)
    steps = bb * pl.cdiv(n, tn)
    if steps % 2 == 1 and n >= 16:
        half = max(8, (pl.cdiv(n, 2) // 8) * 8)
        if half < tn and pl.cdiv(n, half) % 2 == 0:
            tn = half
    return tn


def _vmem_limit_bytes(c, tn, patch_len, d_model):
    """Explicit VMEM budget: double-buffered, lane-padded tiles + headroom."""
    rup = lambda v, m: ((v + m - 1) // m) * m
    in_buf = c * rup(tn, 8) * rup(patch_len, 128) * 4    # lane-padded input tile
    out_buf = rup(tn, 8) * rup(d_model, 128) * 4
    w_buf = rup(c * patch_len, 8) * rup(d_model, 128) * 4
    vec_buf = 4 * 8 * rup(d_model, 128) * 4              # wsum, be, g2, b2
    est = 2 * (in_buf + out_buf + w_buf + vec_buf)       # double buffering
    return int(min(est + (8 << 20), 64 << 20))           # fits v7x's 64 MiB


def _run_patch_encoder(x4, trace_id, patch_len, wk, wsum, be, g2, b2,
                       *, tn_max=256):
    bb, n_traces, c, length = x4.shape
    n = length // patch_len
    d_model = wk.shape[-1]
    assert n * patch_len == length, "seq_len must be a multiple of patch_len"

    # Free (view-only) reshape: no data movement in HBM.
    x6 = x4.reshape(bb, n_traces, c, n, patch_len)

    tn = _choose_tn(n, bb, tn_max)
    grid = (bb, pl.cdiv(n, tn))

    flops = 2 * bb * n * (c * patch_len) * d_model
    bytes_accessed = 4 * (bb * c * length + bb * n * d_model
                          + c * patch_len * d_model + 4 * d_model)
    cost = pl.CostEstimate(flops=flops, transcendentals=2 * bb * n,
                           bytes_accessed=bytes_accessed)

    out = pl.pallas_call(
        _patch_encoder_kernel,
        out_shape=jax.ShapeDtypeStruct((bb, n, d_model), x4.dtype),
        grid=grid,
        in_specs=[
            # Trace selection: block index trace_id on the T axis (static int).
            # TODO(synk): use PrefetchScalarGridSpec scalar prefetch if
            # trace_id ever needs to be a traced (dynamic) value.
            pl.BlockSpec((None, None, c, tn, patch_len),
                         lambda b, j: (b, trace_id, 0, j, 0)),
            pl.BlockSpec((c * patch_len, d_model), lambda b, j: (0, 0)),
            pl.BlockSpec((1, d_model), lambda b, j: (0, 0)),
            pl.BlockSpec((1, d_model), lambda b, j: (0, 0)),
            pl.BlockSpec((1, d_model), lambda b, j: (0, 0)),
            pl.BlockSpec((1, d_model), lambda b, j: (0, 0)),
        ],
        out_specs=pl.BlockSpec((None, tn, d_model), lambda b, j: (b, j, 0)),
        compiler_params=pltpu.CompilerParams(
            dimension_semantics=("parallel", "parallel"),
            vmem_limit_bytes=_vmem_limit_bytes(c, tn, patch_len, d_model)),
        cost_estimate=cost,
    )(x6, wk, wsum, be, g2, b2)
    return out


# -----------------------------------------------------------------------------
# Wrapper: trace-axis handling + folding the einops permutation, LN1 affine,
# and the algebraic-fold column sums into the (tiny) parameters.
# No HBM-sized data movement here.
# -----------------------------------------------------------------------------
def linear_patch_encoder(x, params, *, trace_id=0, patch_len=16, tn_max=256):
    if x.ndim == 5:
        b0, b1_, n_traces, c, length = x.shape
        x4 = x.reshape(b0 * b1_, n_traces, c, length)   # merge leading dims (free)
        lead = (b0, b1_)
    else:
        x4 = x
        lead = (x.shape[0],)
    c = x4.shape[2]
    length = x4.shape[3]
    n = length // patch_len

    w = params["w"]        # (D, P)  torch Linear weight, P columns in (l c) order
    b = params["b"]        # (D,)
    g1 = params["ln1_g"]   # (P,)
    b1 = params["ln1_b"]   # (P,)
    g2 = params["ln2_g"]   # (D,)
    b2 = params["ln2_b"]   # (D,)
    d_model, p_dim = w.shape
    assert p_dim == c * patch_len, (p_dim, c, patch_len)

    # Fold LN1 gamma into the weight, LN1 beta into the bias, permute the
    # weight columns from the einops (l c) order to channel-major (c l) order
    # (so the kernel never rearranges the activation data), and precompute
    # the column sums used by the algebraic LN1 fold.
    w_scaled = w * g1[None, :]                                          # (D, P)
    wk = w_scaled.reshape(d_model, patch_len, c)                        # (D, l, c)
    wk = jnp.transpose(wk, (2, 1, 0)).reshape(c * patch_len, d_model)   # (c*l, D)
    wsum = jnp.sum(w_scaled, axis=1).reshape(1, d_model)                # colsum(Wk)
    be = (b + w @ b1).reshape(1, d_model)                               # (1, D)
    g2r = g2.reshape(1, d_model)
    b2r = b2.reshape(1, d_model)

    out = _run_patch_encoder(x4, trace_id, patch_len, wk, wsum, be, g2r, b2r,
                             tn_max=tn_max)
    return out.reshape(*lead, n, d_model)


# -----------------------------------------------------------------------------
# Pure-JAX reference (straightforward rearrange + LN + Linear + LN)
# -----------------------------------------------------------------------------
def _reference(x, params, *, trace_id=0, patch_len=16):
    trace = x[:, :, trace_id] if x.ndim == 5 else x[:, trace_id]
    *lead, c, length = trace.shape
    n = length // patch_len
    p = trace.reshape(*lead, c, n, patch_len)
    p = jnp.moveaxis(p, -3, -1)                  # (..., n, l, c)
    p = p.reshape(*lead, n, patch_len * c)       # (l c) inner order

    mu = jnp.mean(p, axis=-1, keepdims=True)
    var = jnp.mean(jnp.square(p - mu), axis=-1, keepdims=True)
    pn = (p - mu) * lax.rsqrt(var + LN_EPS)
    pn = pn * params["ln1_g"] + params["ln1_b"]

    y = pn @ params["w"].T + params["b"]

    mu2 = jnp.mean(y, axis=-1, keepdims=True)
    var2 = jnp.mean(jnp.square(y - mu2), axis=-1, keepdims=True)
    yn = (y - mu2) * lax.rsqrt(var2 + LN_EPS)
    return yn * params["ln2_g"] + params["ln2_b"]


# -----------------------------------------------------------------------------
# Main
# -----------------------------------------------------------------------------
if __name__ == "__main__":
    batch, n_traces, in_channel, patch_len = 2, 3, 4, 16
    d_model, trace_id = 128, 1            # d_model matches the module default
    n_patches = 64
    seq_len = n_patches * patch_len       # 1024
    patch_dim = patch_len * in_channel    # 64

    key = jax.random.PRNGKey(0)
    kx, kw, kb, kg1, kb1, kg2, kb2 = jax.random.split(key, 7)

    x = jax.random.normal(kx, (batch, n_traces, in_channel, seq_len), jnp.float32)
    w = jax.random.normal(kw, (d_model, patch_dim), jnp.float32) / jnp.sqrt(patch_dim)
    params = {
        "w": w,                                                    # (D, P)
        "b": 0.1 * jax.random.normal(kb, (d_model,), jnp.float32),
        "ln1_g": 1.0 + 0.1 * jax.random.normal(kg1, (patch_dim,), jnp.float32),
        "ln1_b": 0.1 * jax.random.normal(kb1, (patch_dim,), jnp.float32),
        "ln2_g": 1.0 + 0.1 * jax.random.normal(kg2, (d_model,), jnp.float32),
        "ln2_b": 0.1 * jax.random.normal(kb2, (d_model,), jnp.float32),
    }

    fwd = jax.jit(functools.partial(linear_patch_encoder,
                                    trace_id=trace_id, patch_len=patch_len))
    out = jax.block_until_ready(fwd(x, params))

    expected_shape = (batch, n_patches, d_model)
    assert out.shape == expected_shape, (out.shape, expected_shape)

    ref = _reference(x, params, trace_id=trace_id, patch_len=patch_len)
    max_err = float(jnp.max(jnp.abs(out - ref)))
    assert jnp.allclose(out, ref, atol=1e-4, rtol=1e-4), max_err

    print("KERNEL_OK")
</pallas_src>

<mosaic_0001>
module attributes {stable_mosaic.version = 11 : i64} {
  func.func @_patch_encoder_kernel(%arg0: i32, %arg1: i32, %arg2: memref<1x1x4x64x16xf32, #tpu.memory_space<vmem>>, %arg3: memref<64x128xf32, #tpu.memory_space<vmem>>, %arg4: memref<1x128xf32, #tpu.memory_space<vmem>>, %arg5: memref<1x128xf32, #tpu.memory_space<vmem>>, %arg6: memref<1x128xf32, #tpu.memory_space<vmem>>, %arg7: memref<1x128xf32, #tpu.memory_space<vmem>>, %arg8: memref<1x64x128xf32, #tpu.memory_space<vmem>>) attributes {dimension_semantics = [#tpu.dimension_semantics<parallel>, #tpu.dimension_semantics<parallel>], iteration_bounds = array<i64: 2, 1>, scalar_prefetch = 0 : i64, scratch_operands = 0 : i64, tpu.core_type = #tpu.core_type<tc>, window_params = [{transform_indices = @transform_0, window_bounds = array<i64: 1, 1, 4, 64, 16>}, {pipeline_mode = #tpu.pipeline_mode<synchronous>, transform_indices = @transform_1, window_bounds = array<i64: 64, 128>}, {pipeline_mode = #tpu.pipeline_mode<synchronous>, transform_indices = @transform_2, window_bounds = array<i64: 1, 128>}, {pipeline_mode = #tpu.pipeline_mode<synchronous>, transform_indices = @transform_3, window_bounds = array<i64: 1, 128>}, {pipeline_mode = #tpu.pipeline_mode<synchronous>, transform_indices = @transform_4, window_bounds = array<i64: 1, 128>}, {pipeline_mode = #tpu.pipeline_mode<synchronous>, transform_indices = @transform_5, window_bounds = array<i64: 1, 128>}, {transform_indices = @transform_6, window_bounds = array<i64: 1, 64, 128>}]} {
    %c0 = arith.constant 0 : index
    %c0_0 = arith.constant 0 : index
    %c0_1 = arith.constant 0 : index
    %c0_2 = arith.constant 0 : index
    %c0_3 = arith.constant 0 : index
    %0 = vector.load %arg2[%c0, %c0_0, %c0_1, %c0_2, %c0_3] : memref<1x1x4x64x16xf32, #tpu.memory_space<vmem>>, vector<1x1x1x64x16xf32>
    %1 = vector.shape_cast %0 : vector<1x1x1x64x16xf32> to vector<64x16xf32>
    %c0_4 = arith.constant 0 : index
    %c0_5 = arith.constant 0 : index
    %c1 = arith.constant 1 : index
    %c0_6 = arith.constant 0 : index
    %c0_7 = arith.constant 0 : index
    %2 = vector.load %arg2[%c0_4, %c0_5, %c1, %c0_6, %c0_7] : memref<1x1x4x64x16xf32, #tpu.memory_space<vmem>>, vector<1x1x1x64x16xf32>
    %3 = vector.shape_cast %2 : vector<1x1x1x64x16xf32> to vector<64x16xf32>
    %c0_8 = arith.constant 0 : index
    %c0_9 = arith.constant 0 : index
    %c2 = arith.constant 2 : index
    %c0_10 = arith.constant 0 : index
    %c0_11 = arith.constant 0 : index
    %4 = vector.load %arg2[%c0_8, %c0_9, %c2, %c0_10, %c0_11] : memref<1x1x4x64x16xf32, #tpu.memory_space<vmem>>, vector<1x1x1x64x16xf32>
    %5 = vector.shape_cast %4 : vector<1x1x1x64x16xf32> to vector<64x16xf32>
    %c0_12 = arith.constant 0 : index
    %c0_13 = arith.constant 0 : index
    %c3 = arith.constant 3 : index
    %c0_14 = arith.constant 0 : index
    %c0_15 = arith.constant 0 : index
    %6 = vector.load %arg2[%c0_12, %c0_13, %c3, %c0_14, %c0_15] : memref<1x1x4x64x16xf32, #tpu.memory_space<vmem>>, vector<1x1x1x64x16xf32>
    %7 = vector.shape_cast %6 : vector<1x1x1x64x16xf32> to vector<64x16xf32>
    %8 = tpu.concatenate %1, %3, %5, %7 in 1 : vector<64x16xf32>, vector<64x16xf32>, vector<64x16xf32>, vector<64x16xf32> -> vector<64x64xf32>
    %cst = arith.constant dense<0.000000e+00> : vector<64xf32>
    %9 = vector.multi_reduction <add>, %8, %cst [1] : vector<64x64xf32> to vector<64xf32>
    %10 = vector.shape_cast %9 : vector<64xf32> to vector<64x1xf32>
    %cst_16 = arith.constant 1.562500e-02 : f32
    %11 = vector.broadcast %cst_16 : f32 to vector<64x1xf32>
    %12 = arith.mulf %10, %11 : vector<64x1xf32>
    %13 = arith.mulf %8, %8 : vector<64x64xf32>
    %cst_17 = arith.constant dense<0.000000e+00> : vector<64xf32>
    %14 = vector.multi_reduction <add>, %13, %cst_17 [1] : vector<64x64xf32> to vector<64xf32>
    %15 = vector.shape_cast %14 : vector<64xf32> to vector<64x1xf32>
    %cst_18 = arith.constant 1.562500e-02 : f32
    %16 = vector.broadcast %cst_18 : f32 to vector<64x1xf32>
    %17 = arith.mulf %15, %16 : vector<64x1xf32>
    %18 = arith.mulf %12, %12 : vector<64x1xf32>
    %19 = arith.subf %17, %18 : vector<64x1xf32>
    %cst_19 = arith.constant 0.000000e+00 : f32
    %20 = vector.broadcast %cst_19 : f32 to vector<64x1xf32>
    %21 = arith.maximumf %19, %20 : vector<64x1xf32>
    %cst_20 = arith.constant 9.99999974E-6 : f32
    %22 = vector.broadcast %cst_20 : f32 to vector<64x1xf32>
    %23 = arith.addf %21, %22 : vector<64x1xf32>
    %24 = math.rsqrt %23 : vector<64x1xf32>
    %c0_21 = arith.constant 0 : index
    %c0_22 = arith.constant 0 : index
    %25 = vector.load %arg3[%c0_21, %c0_22] : memref<64x128xf32, #tpu.memory_space<vmem>>, vector<64x128xf32>
    %cst_23 = arith.constant dense<0.000000e+00> : vector<64x128xf32>
    %26 = tpu.matmul %8, %25, %cst_23 {dimension_numbers = #tpu.dot_dimension_numbers<[1], [0], [0], [1], [0, 0, 1, 1], [], []>} : vector<64x64xf32>, vector<64x128xf32>, vector<64x128xf32> -> vector<64x128xf32>
    %27 = vector.broadcast %24 : vector<64x1xf32> to vector<64x128xf32>
    %28 = arith.mulf %26, %27 : vector<64x128xf32>
    %29 = arith.mulf %12, %24 : vector<64x1xf32>
    %c0_24 = arith.constant 0 : index
    %c0_25 = arith.constant 0 : index
    %30 = vector.load %arg4[%c0_24, %c0_25] : memref<1x128xf32, #tpu.memory_space<vmem>>, vector<1x128xf32>
    %31 = vector.broadcast %29 : vector<64x1xf32> to vector<64x128xf32>
    %32 = vector.broadcast %30 : vector<1x128xf32> to vector<64x128xf32>
    %33 = arith.mulf %31, %32 : vector<64x128xf32>
    %34 = arith.subf %28, %33 : vector<64x128xf32>
    %c0_26 = arith.constant 0 : index
    %c0_27 = arith.constant 0 : index
    %35 = vector.load %arg5[%c0_26, %c0_27] : memref<1x128xf32, #tpu.memory_space<vmem>>, vector<1x128xf32>
    %36 = vector.broadcast %35 : vector<1x128xf32> to vector<64x128xf32>
    %37 = arith.addf %34, %36 : vector<64x128xf32>
    %cst_28 = arith.constant dense<0.000000e+00> : vector<64xf32>
    %38 = vector.multi_reduction <add>, %37, %cst_28 [1] : vector<64x128xf32> to vector<64xf32>
    %39 = vector.shape_cast %38 : vector<64xf32> to vector<64x1xf32>
    %cst_29 = arith.constant 7.812500e-03 : f32
    %40 = vector.broadcast %cst_29 : f32 to vector<64x1xf32>
    %41 = arith.mulf %39, %40 : vector<64x1xf32>
    %42 = arith.mulf %37, %37 : vector<64x128xf32>
    %cst_30 = arith.constant dense<0.000000e+00> : vector<64xf32>
    %43 = vector.multi_reduction <add>, %42, %cst_30 [1] : vector<64x128xf32> to vector<64xf32>
    %44 = vector.shape_cast %43 : vector<64xf32> to vector<64x1xf32>
    %cst_31 = arith.constant 7.812500e-03 : f32
    %45 = vector.broadcast %cst_31 : f32 to vector<64x1xf32>
    %46 = arith.mulf %44, %45 : vector<64x1xf32>
    %47 = arith.mulf %41, %41 : vector<64x1xf32>
    %48 = arith.subf %46, %47 : vector<64x1xf32>
    %cst_32 = arith.constant 0.000000e+00 : f32
    %49 = vector.broadcast %cst_32 : f32 to vector<64x1xf32>
    %50 = arith.maximumf %48, %49 : vector<64x1xf32>
    %cst_33 = arith.constant 9.99999974E-6 : f32
    %51 = vector.broadcast %cst_33 : f32 to vector<64x1xf32>
    %52 = arith.addf %50, %51 : vector<64x1xf32>
    %53 = math.rsqrt %52 : vector<64x1xf32>
    %54 = vector.broadcast %41 : vector<64x1xf32> to vector<64x128xf32>
    %55 = arith.subf %37, %54 : vector<64x128xf32>
    %56 = vector.broadcast %53 : vector<64x1xf32> to vector<64x128xf32>
    %57 = arith.mulf %55, %56 : vector<64x128xf32>
    %c0_34 = arith.constant 0 : index
    %c0_35 = arith.constant 0 : index
    %58 = vector.load %arg6[%c0_34, %c0_35] : memref<1x128xf32, #tpu.memory_space<vmem>>, vector<1x128xf32>
    %59 = vector.broadcast %58 : vector<1x128xf32> to vector<64x128xf32>
    %60 = arith.mulf %57, %59 : vector<64x128xf32>
    %c0_36 = arith.constant 0 : index
    %c0_37 = arith.constant 0 : index
    %61 = vector.load %arg7[%c0_36, %c0_37] : memref<1x128xf32, #tpu.memory_space<vmem>>, vector<1x128xf32>
    %62 = vector.broadcast %61 : vector<1x128xf32> to vector<64x128xf32>
    %63 = arith.addf %60, %62 : vector<64x128xf32>
    %c0_38 = arith.constant 0 : index
    %c0_39 = arith.constant 0 : index
    %c0_40 = arith.constant 0 : index
    %64 = vector.load %arg8[%c0_38, %c0_39, %c0_40] : memref<1x64x128xf32, #tpu.memory_space<vmem>>, vector<1x64x128xf32>
    %65 = vector.shape_cast %64 : vector<1x64x128xf32> to vector<64x128xf32>
    %66 = vector.shape_cast %63 : vector<64x128xf32> to vector<1x64x128xf32>
    tpu.vector_store %arg8[%c0_38, %c0_39, %c0_40], %66 {strides = array<i32>} : memref<1x64x128xf32, #tpu.memory_space<vmem>>, vector<1x64x128xf32>,
    return
  }
  func.func @transform_0(%arg0: i32, %arg1: i32) -> (i32, i32, i32, i32, i32) {
    %c1_i32 = arith.constant 1 : i32
    %c0_i32 = arith.constant 0 : i32
    %c0_i32_0 = arith.constant 0 : i32
    %c0_i32_1 = arith.constant 0 : i32
    return %arg0, %c1_i32, %c0_i32, %arg1, %c0_i32_0 : i32, i32, i32, i32, i32
  }
  func.func @transform_1(%arg0: i32, %arg1: i32) -> (i32, i32) {
    %c0_i32 = arith.constant 0 : i32
    %c0_i32_0 = arith.constant 0 : i32
    %c0_i32_1 = arith.constant 0 : i32
    return %c0_i32, %c0_i32_0 : i32, i32
  }
  func.func @transform_2(%arg0: i32, %arg1: i32) -> (i32, i32) {
    %c0_i32 = arith.constant 0 : i32
    %c0_i32_0 = arith.constant 0 : i32
    %c0_i32_1 = arith.constant 0 : i32
    return %c0_i32, %c0_i32_0 : i32, i32
  }
  func.func @transform_3(%arg0: i32, %arg1: i32) -> (i32, i32) {
    %c0_i32 = arith.constant 0 : i32
    %c0_i32_0 = arith.constant 0 : i32
    %c0_i32_1 = arith.constant 0 : i32
    return %c0_i32, %c0_i32_0 : i32, i32
  }
  func.func @transform_4(%arg0: i32, %arg1: i32) -> (i32, i32) {
    %c0_i32 = arith.constant 0 : i32
    %c0_i32_0 = arith.constant 0 : i32
    %c0_i32_1 = arith.constant 0 : i32
    return %c0_i32, %c0_i32_0 : i32, i32
  }
  func.func @transform_5(%arg0: i32, %arg1: i32) -> (i32, i32) {
    %c0_i32 = arith.constant 0 : i32
    %c0_i32_0 = arith.constant 0 : i32
    %c0_i32_1 = arith.constant 0 : i32
    return %c0_i32, %c0_i32_0 : i32, i32
  }
  func.func @transform_6(%arg0: i32, %arg1: i32) -> (i32, i32, i32) {
    %c0_i32 = arith.constant 0 : i32
    %c0_i32_0 = arith.constant 0 : i32
    return %arg0, %arg1, %c0_i32 : i32, i32, i32
  }
}

</mosaic_0001>

<llo_original>
// kernel: linear_patch_encoder.1
$region0: #{linear_patch_encoder.1}
  #allocation0 [shape = 'u32[]', space=smem, size = 0x4, offset = 0x4, fixed_abs, tag = 'smem constant byte address 0x4 - core index']
  #allocation1 [shape = 'u32[144,128]{1,0:T(1,128)}', space=vmem, size = 0x12000, scoped, tag = 'internal scratch']
  %s0 = inlined_call_operand.vmem [shape: f32[2,3,4,64,16], index: 0, kind: input, shape index: {}]
  %s1 = inlined_call_operand.vmem [shape: f32[64,128], index: 1, kind: input, shape index: {}]
  %s2 = inlined_call_operand.vmem [shape: f32[1,128], index: 2, kind: input, shape index: {}]
  %s3 = inlined_call_operand.vmem [shape: f32[1,128], index: 3, kind: input, shape index: {}]
  %s4 = inlined_call_operand.vmem [shape: f32[1,128], index: 4, kind: input, shape index: {}]
  %s5 = inlined_call_operand.vmem [shape: f32[1,128], index: 5, kind: input, shape index: {}]
  %s6 = inlined_call_operand.hbm [shape: f32[2,64,128], index: 6, kind: output, shape index: {}]
  %s7 = sld [smem:[#allocation0]]
  $region57: #{linear_patch_encoder.1} parent=0
    _
  %s9 = ssub.s32 1, %s7
  %s10 = scalar_select 0, %s9, %s7
  $region1: #{linear_patch_encoder.1} parent=0
    #allocation2 [shape = 'u8[65536]{0}', space=vmem, size = 0x10000, scoped, tag = 'output window, operand 0']
    #allocation3 [shape = 's32[2]{0}', space=sflag, size = 0x8, scoped, tag = 'scoped memory for linear_patch_encoder.1']
    %11 = vsyncpa [#allocation3], 0
    %s12 = scalar_lea.sflag [#allocation3], 1
    %13 = vsyncpa %s12, 0
    loop: start=0, step=1, limit=4
    $region2: #{linear_patch_encoder.1} parent=1 // loop_pre_header
      _
    $region3: #{linear_patch_encoder.1} parent=1 // loop_header
      %s15 = sphi 0, %s19
      %p16 = scmp.ge.s32.totalorder %s15, 4
      %s22 = sphi 0, %s34
      %s23 = sphi 0, %s30
      %s24 = sphi 0, %s22
      %s25 = sphi 0, %s23
      %s26 = sphi 0, %s24
      %s27 = sphi 0, %s25
      %s39 = sphi 0, %s41
      %s42 = sphi 0, %s39
      %s43 = sphi 0, %s42
      %s59 = sphi 0, %s43
      %s63 = sphi 0, %s63
      %s65 = sphi 0, %s63
      %s66 = sphi 0, %s65
      %s80 = sphi 0, %s66
      %s84 = sphi 0, %s84
      %s86 = sphi 0, %s84
      %s87 = sphi 0, %s86
      %s101 = sphi 0, %s87
      %s105 = sphi 0, %s105
      %s107 = sphi 0, %s105
      %s108 = sphi 0, %s107
      %s122 = sphi 0, %s108
      %s126 = sphi 0, %s126
      %s128 = sphi 0, %s126
      %s129 = sphi 0, %s128
      %s143 = sphi 0, %s129
      %s147 = sphi 0, %s147
      %s149 = sphi 0, %s147
      %s150 = sphi 0, %s149
      %s164 = sphi 0, %s150
      %s172 = sphi 0, %s174
      %s175 = sphi 0, %s172
      %s176 = sphi 0, %s175
      %s192 = sphi 0, %s176
    $region4: #{linear_patch_encoder.1} parent=1 // loop_header_branch
      %18 = sbr.rel (%p16) target = $region8
    $region5: #{linear_patch_encoder.1} parent=1 // loop_body
      %s20 = ssub.s32 %s15, 1
      %s21 = ssub.s32 %s15, 2
      %s28 = sadd.s32 1, %s23
      %p29 = scmp.ge.s32.totalorder %s28, 1
      %s30 = scalar_select %p29, 0, %s28
      %s31 = sadd.s32 1, %s22
      %s32 = scalar_select %p29, %s31, %s22
      %p33 = scmp.ge.s32.totalorder %s32, 2
      %s34 = scalar_select %p33, 0, %s32
      %s35 = ssub.s32 %s22, %s34
      %s36 = ssub.s32 %s23, %s30
      %s37 = sor.u32 %s35, %s36
      %p38 = scmp.eq.s32.totalorder %s37, 0
      %s40 = sadd.s32 %s39, 1
      %s41 = scalar_select %p38, %s39, %s40
      %p44 = pneg %p38
      %p45 = scmp.eq.s32.totalorder %s15, 1
      %p46 = por %p44, %p45
      %p47 = scmp.ne.s32.totalorder %s39, %s42
      %p48 = scmp.eq.s32.totalorder %s15, 0
      %p49 = por %p47, %p48
      %p50 = scmp.ne.s32.totalorder %s39, %s42
      %p51 = scmp.eq.s32.totalorder %s20, 1
      %p52 = por %p50, %p51
      %p53 = scmp.ne.s32.totalorder %s42, %s43
      %p54 = scmp.eq.s32.totalorder %s20, 0
      %p55 = por %p53, %p54
      %p56 = scmp.ne.s32.totalorder %s42, %s43
      %p57 = scmp.eq.s32.totalorder %s21, 1
      %p58 = por %p56, %p57
      %p60 = scmp.ne.s32.totalorder %s43, %s59
      %p61 = scmp.eq.s32.totalorder %s21, 0
      %p62 = por %p60, %p61
      %s64 = sadd.s32 %s63, 1
      %p67 = scmp.eq.s32.totalorder %s15, 1
      %p68 = scmp.ne.s32.totalorder %s63, %s65
      %p69 = scmp.eq.s32.totalorder %s15, 0
      %p70 = por %p68, %p69
      %p71 = scmp.ne.s32.totalorder %s63, %s65
      %p72 = scmp.eq.s32.totalorder %s20, 1
      %p73 = por %p71, %p72
      %p74 = scmp.ne.s32.totalorder %s65, %s66
      %p75 = scmp.eq.s32.totalorder %s20, 0
      %p76 = por %p74, %p75
      %p77 = scmp.ne.s32.totalorder %s65, %s66
      %p78 = scmp.eq.s32.totalorder %s21, 1
      %p79 = por %p77, %p78
      %p81 = scmp.ne.s32.totalorder %s66, %s80
      %p82 = scmp.eq.s32.totalorder %s21, 0
      %p83 = por %p81, %p82
      %s85 = sadd.s32 %s84, 1
      %p88 = scmp.eq.s32.totalorder %s15, 1
      %p89 = scmp.ne.s32.totalorder %s84, %s86
      %p90 = scmp.eq.s32.totalorder %s15, 0
      %p91 = por %p89, %p90
      %p92 = scmp.ne.s32.totalorder %s84, %s86
      %p93 = scmp.eq.s32.totalorder %s20, 1
      %p94 = por %p92, %p93
      %p95 = scmp.ne.s32.totalorder %s86, %s87
      %p96 = scmp.eq.s32.totalorder %s20, 0
      %p97 = por %p95, %p96
      %p98 = scmp.ne.s32.totalorder %s86, %s87
      %p99 = scmp.eq.s32.totalorder %s21, 1
      %p100 = por %p98, %p99
      %p102 = scmp.ne.s32.totalorder %s87, %s101
      %p103 = scmp.eq.s32.totalorder %s21, 0
      %p104 = por %p102, %p103
      %s106 = sadd.s32 %s105, 1
      %p109 = scmp.eq.s32.totalorder %s15, 1
      %p110 = scmp.ne.s32.totalorder %s105, %s107
      %p111 = scmp.eq.s32.totalorder %s15, 0
      %p112 = por %p110, %p111
      %p113 = scmp.ne.s32.totalorder %s105, %s107
      %p114 = scmp.eq.s32.totalorder %s20, 1
      %p115 = por %p113, %p114
      %p116 = scmp.ne.s32.totalorder %s107, %s108
      %p117 = scmp.eq.s32.totalorder %s20, 0
      %p118 = por %p116, %p117
      %p119 = scmp.ne.s32.totalorder %s107, %s108
      %p120 = scmp.eq.s32.totalorder %s21, 1
      %p121 = por %p119, %p120
      %p123 = scmp.ne.s32.totalorder %s108, %s122
      %p124 = scmp.eq.s32.totalorder %s21, 0
      %p125 = por %p123, %p124
      %s127 = sadd.s32 %s126, 1
      %p130 = scmp.eq.s32.totalorder %s15, 1
      %p131 = scmp.ne.s32.totalorder %s126, %s128
      %p132 = scmp.eq.s32.totalorder %s15, 0
      %p133 = por %p131, %p132
      %p134 = scmp.ne.s32.totalorder %s126, %s128
      %p135 = scmp.eq.s32.totalorder %s20, 1
      %p136 = por %p134, %p135
      %p137 = scmp.ne.s32.totalorder %s128, %s129
      %p138 = scmp.eq.s32.totalorder %s20, 0
      %p139 = por %p137, %p138
      %p140 = scmp.ne.s32.totalorder %s128, %s129
      %p141 = scmp.eq.s32.totalorder %s21, 1
      %p142 = por %p140, %p141
      %p144 = scmp.ne.s32.totalorder %s129, %s143
      %p145 = scmp.eq.s32.totalorder %s21, 0
      %p146 = por %p144, %p145
      %s148 = sadd.s32 %s147, 1
      %p151 = scmp.eq.s32.totalorder %s15, 1
      %p152 = scmp.ne.s32.totalorder %s147, %s149
      %p153 = scmp.eq.s32.totalorder %s15, 0
      %p154 = por %p152, %p153
      %p155 = scmp.ne.s32.totalorder %s147, %s149
      %p156 = scmp.eq.s32.totalorder %s20, 1
      %p157 = por %p155, %p156
      %p158 = scmp.ne.s32.totalorder %s149, %s150
      %p159 = scmp.eq.s32.totalorder %s20, 0
      %p160 = por %p158, %p159
      %p161 = scmp.ne.s32.totalorder %s149, %s150
      %p162 = scmp.eq.s32.totalorder %s21, 1
      %p163 = por %p161, %p162
      %p165 = scmp.ne.s32.totalorder %s150, %s164
      %p166 = scmp.eq.s32.totalorder %s21, 0
      %p167 = por %p165, %p166
      %s168 = ssub.s32 %s22, %s34
      %s169 = ssub.s32 %s23, %s30
      %s170 = sor.u32 %s168, %s169
      %p171 = scmp.eq.s32.totalorder %s170, 0
      %s173 = sadd.s32 %s172, 1
      %s174 = scalar_select %p171, %s172, %s173
      %p177 = pneg %p171
      %p178 = scmp.eq.s32.totalorder %s15, 1
      %p179 = por %p177, %p178
      %p180 = scmp.ne.s32.totalorder %s172, %s175
      %p181 = scmp.eq.s32.totalorder %s15, 0
      %p182 = por %p180, %p181
      %p183 = scmp.ne.s32.totalorder %s172, %s175
      %p184 = scmp.eq.s32.totalorder %s20, 1
      %p185 = por %p183, %p184
      %p186 = scmp.ne.s32.totalorder %s175, %s176
      %p187 = scmp.eq.s32.totalorder %s20, 0
      %p188 = por %p186, %p187
      %p189 = scmp.ne.s32.totalorder %s175, %s176
      %p190 = scmp.eq.s32.totalorder %s21, 1
      %p191 = por %p189, %p190
      %p193 = scmp.ne.s32.totalorder %s176, %s192
      %p194 = scmp.eq.s32.totalorder %s21, 0
      %p195 = por %p193, %p194
      %p196 = scmp.le.s32.totalorder 1, %s15
      %p197 = scmp.lt.s32.totalorder %s15, 3
      %p198 = pnand %p196, %p197
      %p199 = pneg %p198
      // Predicated region
      $region9: #{linear_patch_encoder.1} parent=5 // pred_check
        _
      $region10: #{linear_patch_encoder.1} parent=5 // pred_check_branch
        %201 = sbr.rel (%p198) target = $region12
      $region11: #{linear_patch_encoder.1} parent=5 // pred_region
        %s202 = ssub.s32 %s15, 1
        // Predicated region
        $region13: #{linear_patch_encoder.1} parent=11 // pred_check
          %p203 = pneg %p76
        $region14: #{linear_patch_encoder.1} parent=11 // pred_check_branch
          %205 = sbr.rel (%p203) target = $region16
        $region15: #{linear_patch_encoder.1} parent=11 // pred_region
          _
        $region16: #{linear_patch_encoder.1} parent=11 // pred_fallthru
          _
        // Predicated region
        $region17: #{linear_patch_encoder.1} parent=11 // pred_check
          %p206 = pneg %p97
        $region18: #{linear_patch_encoder.1} parent=11 // pred_check_branch
          %208 = sbr.rel (%p206) target = $region20
        $region19: #{linear_patch_encoder.1} parent=11 // pred_region
          _
        $region20: #{linear_patch_encoder.1} parent=11 // pred_fallthru
          _
        // Predicated region
        $region21: #{linear_patch_encoder.1} parent=11 // pred_check
          %p209 = pneg %p118
        $region22: #{linear_patch_encoder.1} parent=11 // pred_check_branch
          %211 = sbr.rel (%p209) target = $region24
        $region23: #{linear_patch_encoder.1} parent=11 // pred_region
          _
        $region24: #{linear_patch_encoder.1} parent=11 // pred_fallthru
          _
        // Predicated region
        $region25: #{linear_patch_encoder.1} parent=11 // pred_check
          %p212 = pneg %p139
        $region26: #{linear_patch_encoder.1} parent=11 // pred_check_branch
          %214 = sbr.rel (%p212) target = $region28
        $region27: #{linear_patch_encoder.1} parent=11 // pred_region
          _
        $region28: #{linear_patch_encoder.1} parent=11 // pred_fallthru
          _
        // Predicated region
        $region29: #{linear_patch_encoder.1} parent=11 // pred_check
          %p215 = pneg %p160
        $region30: #{linear_patch_encoder.1} parent=11 // pred_check_branch
          %217 = sbr.rel (%p215) target = $region32
        $region31: #{linear_patch_encoder.1} parent=11 // pred_region
          _
        $region32: #{linear_patch_encoder.1} parent=11 // pred_fallthru
          _
      $region12: #{linear_patch_encoder.1} parent=5 // pred_fallthru
        _
      %p218 = scmp.lt.s32.totalorder %s15, 2
      // Predicated region
      $region33: #{linear_patch_encoder.1} parent=5 // pred_check
        %p219 = pneg %p218
      $region34: #{linear_patch_encoder.1} parent=5 // pred_check_branch
        %221 = sbr.rel (%p219) target = $region36
      $region35: #{linear_patch_encoder.1} parent=5 // pred_region
        // Predicated region
        $region37: #{linear_patch_encoder.1} parent=35 // pred_check
          %p222 = pneg %p49
        $region38: #{linear_patch_encoder.1} parent=35 // pred_check_branch
          %224 = sbr.rel (%p222) target = $region40
        $region39: #{linear_patch_encoder.1} parent=35 // pred_region
          %s225 = smul.u32 8, %s23
          %p226 = scmp.lt.s32.totalorder %s22, 1
          %s227 = scalar_select %p226, %s22, 1
          %p228 = scmp.lt.s32.totalorder %s225, 7
          %s229 = scalar_select %p228, %s225, 7
          %s230 = sadd.s32 %s229, 32
          %s231 = smul.addr %s227, 96
          %s232 = sadd.s32 %s230, %s231
          %s233 = smul.addr %s232, 8
          %s234 = scalar_lea.vmem %s0, %s233
          %s235 = smul.u32 8, %s23
        $region40: #{linear_patch_encoder.1} parent=35 // pred_fallthru
          _
      $region36: #{linear_patch_encoder.1} parent=5 // pred_fallthru
        _
      %p236 = scmp.le.s32.totalorder 1, %s15
      %p237 = scmp.lt.s32.totalorder %s15, 3
      %p238 = pnand %p236, %p237
      %p239 = pneg %p238
      // Predicated region
      $region41: #{linear_patch_encoder.1} parent=5 // pred_check
        _
      $region42: #{linear_patch_encoder.1} parent=5 // pred_check_branch
        %241 = sbr.rel (%p238) target = $region44
      $region43: #{linear_patch_encoder.1} parent=5 // pred_region
        %s242 = ssub.s32 %s15, 1
        %s243 = smul.u32 8, %s25
        %p244 = scmp.lt.s32.totalorder %s24, 1
        %s245 = scalar_select %p244, %s24, 1
        %p246 = scmp.lt.s32.totalorder %s243, 7
        %s247 = scalar_select %p246, %s243, 7
        %s248 = sadd.s32 %s247, 32
        %s249 = smul.addr %s245, 96
        %s250 = sadd.s32 %s248, %s249
        %s251 = smul.addr %s250, 8
        %s252 = scalar_lea.vmem %s0, %s251
        %p253 = pneg %p55
        %p254 = pneg %p52
        %p255 = pneg %p76
        %p256 = pneg %p73
        %p257 = pneg %p97
        %p258 = pneg %p94
        %p259 = pneg %p118
        %p260 = pneg %p115
        %p261 = pneg %p139
        %p262 = pneg %p136
        %p263 = pneg %p160
        %p264 = pneg %p157
        %p265 = pneg %p188
        %p266 = pneg %p185
        %s267 = sand.u32 %s175, 1
        %s268 = scalar_lea.sflag [#allocation3], %s267
        %s269 = sand.u32 %s175, 1
        %s270 = smul.addr %s269, 64
        %s271 = scalar_lea.vmem [#allocation2], %s270
        %s272 = smul.u32 8, %s25
        %p273 = scmp.lt.s32.totalorder %s24, 1
        %s274 = scalar_select %p273, %s24, 1
        %p275 = scmp.lt.s32.totalorder %s272, 7
        %s276 = scalar_select %p275, %s272, 7
        %s277 = sadd.s32 %s276, 32
        %s278 = smul.addr %s274, 96
        %s279 = sadd.s32 %s277, %s278
        %s280 = smul.addr %s279, 8
        %s281 = scalar_lea.vmem %s0, %s280
        %s282 = smul.u32 8, %s25
        %s283 = smul.u32 8, %s25
        %v284 = vld [vmem:[%s281] sm:$0xff]
        %v285 = vld [vmem:[%s281 + $0x8] sm:$0xff]
        %v286 = vld [vmem:[%s281 + $0x10] sm:$0xff]
        %v287 = vld [vmem:[%s281 + $0x18] sm:$0xff]
        %v288 = vld [vmem:[%s281 + $0x20] sm:$0xff]
        %v289 = vld [vmem:[%s281 + $0x28] sm:$0xff]
        %v290 = vld [vmem:[%s281 + $0x30] sm:$0xff]
        %v291 = vld [vmem:[%s281 + $0x38] sm:$0xff]
        %s292 = scalar_lea.vmem %s281, 64
        %v293 = vld [vmem:[%s292] sm:$0xff]
        %v294 = vld [vmem:[%s292 + $0x8] sm:$0xff]
        %v295 = vld [vmem:[%s292 + $0x10] sm:$0xff]
        %v296 = vld [vmem:[%s292 + $0x18] sm:$0xff]
        %v297 = vld [vmem:[%s292 + $0x20] sm:$0xff]
        %v298 = vld [vmem:[%s292 + $0x28] sm:$0xff]
        %v299 = vld [vmem:[%s292 + $0x30] sm:$0xff]
        %v300 = vld [vmem:[%s292 + $0x38] sm:$0xff]
        %s301 = scalar_lea.vmem %s281, 128
        %v302 = vld [vmem:[%s301] sm:$0xff]
        %v303 = vld [vmem:[%s301 + $0x8] sm:$0xff]
        %v304 = vld [vmem:[%s301 + $0x10] sm:$0xff]
        %v305 = vld [vmem:[%s301 + $0x18] sm:$0xff]
        %v306 = vld [vmem:[%s301 + $0x20] sm:$0xff]
        %v307 = vld [vmem:[%s301 + $0x28] sm:$0xff]
        %v308 = vld [vmem:[%s301 + $0x30] sm:$0xff]
        %v309 = vld [vmem:[%s301 + $0x38] sm:$0xff]
        %s310 = scalar_lea.vmem %s281, 192
        %v311 = vld [vmem:[%s310] sm:$0xff]
        %v312 = vld [vmem:[%s310 + $0x8] sm:$0xff]
        %v313 = vld [vmem:[%s310 + $0x10] sm:$0xff]
        %v314 = vld [vmem:[%s310 + $0x18] sm:$0xff]
        %v315 = vld [vmem:[%s310 + $0x20] sm:$0xff]
        %v316 = vld [vmem:[%s310 + $0x28] sm:$0xff]
        %v317 = vld [vmem:[%s310 + $0x30] sm:$0xff]
        %v318 = vld [vmem:[%s310 + $0x38] sm:$0xff]
        %327 = vrot.lane.b32.xlu0 %v293, 16
        %v328 = vpop.permute.xlu0 %327
        %329 = vrot.lane.b32.xlu0 %v294, 16
        %v330 = vpop.permute.xlu0 %329
        %331 = vrot.lane.b32.xlu0 %v295, 16
        %v332 = vpop.permute.xlu0 %331
        %333 = vrot.lane.b32.xlu0 %v296, 16
        %v334 = vpop.permute.xlu0 %333
        %335 = vrot.lane.b32.xlu0 %v297, 16
        %v336 = vpop.permute.xlu0 %335
        %337 = vrot.lane.b32.xlu0 %v298, 16
        %v338 = vpop.permute.xlu0 %337
        %339 = vrot.lane.b32.xlu0 %v299, 16
        %v340 = vpop.permute.xlu0 %339
        %341 = vrot.lane.b32.xlu0 %v300, 16
        %v342 = vpop.permute.xlu0 %341
        %359 = vrot.lane.b32.xlu0 %v302, 32
        %v360 = vpop.permute.xlu0 %359
        %361 = vrot.lane.b32.xlu0 %v303, 32
        %v362 = vpop.permute.xlu0 %361
        %363 = vrot.lane.b32.xlu0 %v304, 32
        %v364 = vpop.permute.xlu0 %363
        %365 = vrot.lane.b32.xlu0 %v305, 32
        %v366 = vpop.permute.xlu0 %365
        %367 = vrot.lane.b32.xlu0 %v306, 32
        %v368 = vpop.permute.xlu0 %367
        %369 = vrot.lane.b32.xlu0 %v307, 32
        %v370 = vpop.permute.xlu0 %369
        %371 = vrot.lane.b32.xlu0 %v308, 32
        %v372 = vpop.permute.xlu0 %371
        %373 = vrot.lane.b32.xlu0 %v309, 32
        %v374 = vpop.permute.xlu0 %373
        %391 = vrot.lane.b32.xlu0 %v311, 48
        %v392 = vpop.permute.xlu0 %391
        %393 = vrot.lane.b32.xlu0 %v312, 48
        %v394 = vpop.permute.xlu0 %393
        %395 = vrot.lane.b32.xlu0 %v313, 48
        %v396 = vpop.permute.xlu0 %395
        %397 = vrot.lane.b32.xlu0 %v314, 48
        %v398 = vpop.permute.xlu0 %397
        %399 = vrot.lane.b32.xlu0 %v315, 48
        %v400 = vpop.permute.xlu0 %399
        %401 = vrot.lane.b32.xlu0 %v316, 48
        %v402 = vpop.permute.xlu0 %401
        %403 = vrot.lane.b32.xlu0 %v317, 48
        %v404 = vpop.permute.xlu0 %403
        %405 = vrot.lane.b32.xlu0 %v318, 48
        %v406 = vpop.permute.xlu0 %405
        %vm415 = vcmask 130048
        %v416 = vsel %vm415, %v284, %v328
        %v417 = vsel %vm415, %v285, %v330
        %v418 = vsel %vm415, %v286, %v332
        %v419 = vsel %vm415, %v287, %v334
        %v420 = vsel %vm415, %v288, %v336
        %v421 = vsel %vm415, %v289, %v338
        %v422 = vsel %vm415, %v290, %v340
        %v423 = vsel %vm415, %v291, %v342
        %vm424 = vcmask 261120
        %v425 = vsel %vm424, %v416, %v360
        %v426 = vsel %vm424, %v417, %v362
        %v427 = vsel %vm424, %v418, %v364
        %v428 = vsel %vm424, %v419, %v366
        %v429 = vsel %vm424, %v420, %v368
        %v430 = vsel %vm424, %v421, %v370
        %v431 = vsel %vm424, %v422, %v372
        %v432 = vsel %vm424, %v423, %v374
        %vm433 = vcmask 392192
        %v434 = vsel %vm433, %v425, %v392
        %v435 = vsel %vm433, %v426, %v394
        %v436 = vsel %vm433, %v427, %v396
        %v437 = vsel %vm433, %v428, %v398
        %v438 = vsel %vm433, %v429, %v400
        %v439 = vsel %vm433, %v430, %v402
        %v440 = vsel %vm433, %v431, %v404
        %v441 = vsel %vm433, %v432, %v406
        %vm442 = vcmask 523264
        %v443 = vsel %vm442, %v434, 0.0
        %444 = vadd.xlane.f32.xlu0 %v443
        %v445 = vpop.xlane.xlu0 %444
        %v446 = vsel %vm442, %v435, 0.0
        %447 = vadd.xlane.f32.xlu0 %v446
        %v448 = vpop.xlane.xlu0 %447
        %v449 = vsel %vm442, %v436, 0.0
        %450 = vadd.xlane.f32.xlu0 %v449
        %v451 = vpop.xlane.xlu0 %450
        %v452 = vsel %vm442, %v437, 0.0
        %453 = vadd.xlane.f32.xlu0 %v452
        %v454 = vpop.xlane.xlu0 %453
        %v455 = vsel %vm442, %v438, 0.0
        %456 = vadd.xlane.f32.xlu0 %v455
        %v457 = vpop.xlane.xlu0 %456
        %v458 = vsel %vm442, %v439, 0.0
        %459 = vadd.xlane.f32.xlu0 %v458
        %v460 = vpop.xlane.xlu0 %459
        %v461 = vsel %vm442, %v440, 0.0
        %462 = vadd.xlane.f32.xlu0 %v461
        %v463 = vpop.xlane.xlu0 %462
        %v464 = vsel %vm442, %v441, 0.0
        %465 = vadd.xlane.f32.xlu0 %v464
        %v466 = vpop.xlane.xlu0 %465
        %v467 = vmul.f32 %v445, 0.015625
        %v468 = vmul.f32 %v448, 0.015625
        %v469 = vmul.f32 %v451, 0.015625
        %v470 = vmul.f32 %v454, 0.015625
        %v471 = vmul.f32 %v457, 0.015625
        %v472 = vmul.f32 %v460, 0.015625
        %v473 = vmul.f32 %v463, 0.015625
        %v474 = vmul.f32 %v466, 0.015625
        %v475 = vmul.f32 %v434, %v434
        %v476 = vmul.f32 %v435, %v435
        %v477 = vmul.f32 %v436, %v436
        %v478 = vmul.f32 %v437, %v437
        %v479 = vmul.f32 %v438, %v438
        %v480 = vmul.f32 %v439, %v439
        %v481 = vmul.f32 %v440, %v440
        %v482 = vmul.f32 %v441, %v441
        %v483 = vsel %vm442, %v475, 0.0
        %484 = vadd.xlane.f32.xlu0 %v483
        %v485 = vpop.xlane.xlu0 %484
        %v486 = vsel %vm442, %v476, 0.0
        %487 = vadd.xlane.f32.xlu0 %v486
        %v488 = vpop.xlane.xlu0 %487
        %v489 = vsel %vm442, %v477, 0.0
        %490 = vadd.xlane.f32.xlu0 %v489
        %v491 = vpop.xlane.xlu0 %490
        %v492 = vsel %vm442, %v478, 0.0
        %493 = vadd.xlane.f32.xlu0 %v492
        %v494 = vpop.xlane.xlu0 %493
        %v495 = vsel %vm442, %v479, 0.0
        %496 = vadd.xlane.f32.xlu0 %v495
        %v497 = vpop.xlane.xlu0 %496
        %v498 = vsel %vm442, %v480, 0.0
        %499 = vadd.xlane.f32.xlu0 %v498
        %v500 = vpop.xlane.xlu0 %499
        %v501 = vsel %vm442, %v481, 0.0
        %502 = vadd.xlane.f32.xlu0 %v501
        %v503 = vpop.xlane.xlu0 %502
        %v504 = vsel %vm442, %v482, 0.0
        %505 = vadd.xlane.f32.xlu0 %v504
        %v506 = vpop.xlane.xlu0 %505
        %v507 = vmul.f32 %v485, 0.015625
        %v508 = vmul.f32 %v488, 0.015625
        %v509 = vmul.f32 %v491, 0.015625
        %v510 = vmul.f32 %v494, 0.015625
        %v511 = vmul.f32 %v497, 0.015625
        %v512 = vmul.f32 %v500, 0.015625
        %v513 = vmul.f32 %v503, 0.015625
        %v514 = vmul.f32 %v506, 0.015625
        %v515 = vmul.f32 %v467, %v467
        %v516 = vmul.f32 %v468, %v468
        %v517 = vmul.f32 %v469, %v469
        %v518 = vmul.f32 %v470, %v470
        %v519 = vmul.f32 %v471, %v471
        %v520 = vmul.f32 %v472, %v472
        %v521 = vmul.f32 %v473, %v473
        %v522 = vmul.f32 %v474, %v474
        %v523 = vsub.f32 %v507, %v515
        %v524 = vsub.f32 %v508, %v516
        %v525 = vsub.f32 %v509, %v517
        %v526 = vsub.f32 %v510, %v518
        %v527 = vsub.f32 %v511, %v519
        %v528 = vsub.f32 %v512, %v520
        %v529 = vsub.f32 %v513, %v521
        %v530 = vsub.f32 %v514, %v522
        %v531 = vmax.f32 %v523, 0.0
        %v532 = vmax.f32 %v524, 0.0
        %v533 = vmax.f32 %v525, 0.0
        %v534 = vmax.f32 %v526, 0.0
        %v535 = vmax.f32 %v527, 0.0
        %v536 = vmax.f32 %v528, 0.0
        %v537 = vmax.f32 %v529, 0.0
        %v538 = vmax.f32 %v530, 0.0
        %v539 = vadd.f32 %v531, 1e-05
        %v540 = vadd.f32 %v532, 1e-05
        %v541 = vadd.f32 %v533, 1e-05
        %v542 = vadd.f32 %v534, 1e-05
        %v543 = vadd.f32 %v535, 1e-05
        %v544 = vadd.f32 %v536, 1e-05
        %v545 = vadd.f32 %v537, 1e-05
        %v546 = vadd.f32 %v538, 1e-05
        %v547 = vrsqrt.pop %v539
        %v548 = vrsqrt.pop %v540
        %v549 = vrsqrt.pop %v541
        %v550 = vrsqrt.pop %v542
        %v551 = vrsqrt.pop %v543
        %v552 = vrsqrt.pop %v544
        %v553 = vrsqrt.pop %v545
        %v554 = vrsqrt.pop %v546
        %v555 = vld [vmem:[%s1] sm:$0xff]
        %v556 = vld [vmem:[%s1 + $0x8] sm:$0xff]
        %v557 = vld [vmem:[%s1 + $0x10] sm:$0xff]
        %v558 = vld [vmem:[%s1 + $0x18] sm:$0xff]
        %v559 = vld [vmem:[%s1 + $0x20] sm:$0xff]
        %v560 = vld [vmem:[%s1 + $0x28] sm:$0xff]
        %v561 = vld [vmem:[%s1 + $0x30] sm:$0xff]
        %v562 = vld [vmem:[%s1 + $0x38] sm:$0xff]
        %v564 = vsel %vm442, %v434, 0
        %v567 = vsel %vm442, %v435, 0
        %v570 = vsel %vm442, %v436, 0
        %v573 = vsel %vm442, %v437, 0
        %v576 = vsel %vm442, %v438, 0
        %v579 = vsel %vm442, %v439, 0
        %v582 = vsel %vm442, %v440, 0
        %v585 = vsel %vm442, %v441, 0
        %587 = vmatprep.subr.mxu0 0.0
        %588 = vmatpush1.msra.mxu0 %v555
        %589 = vmatprep.subr.mxu0 0.0
        %590 = vmatpush1.msra.mxu0 %v556
        %591 = vmatprep.subr.mxu0 0.0
        %592 = vmatpush1.msra.mxu0 %v557
        %593 = vmatprep.subr.mxu0 0.0
        %594 = vmatpush1.msra.mxu0 %v558
        %595 = vmatprep.subr.mxu0 0.0
        %596 = vmatpush1.msra.mxu0 %v559
        %597 = vmatprep.subr.mxu0 0.0
        %598 = vmatpush1.msra.mxu0 %v560
        %599 = vmatprep.subr.mxu0 0.0
        %600 = vmatpush1.msra.mxu0 %v561
        %601 = vmatprep.subr.mxu0 0.0
        %602 = vmatpush1.msra.mxu0 %v562
        %603 = vmatprep.subr.mxu0 0.0
        %604 = vmatpush1.msra.mxu0 0.0
        %605 = vmatprep.subr.mxu0 0.0
        %606 = vmatpush1.msra.mxu0 0.0
        %607 = vmatprep.subr.mxu0 0.0
        %608 = vmatpush1.msra.mxu0 0.0
        %609 = vmatprep.subr.mxu0 0.0
        %610 = vmatpush1.msra.mxu0 0.0
        %611 = vmatprep.subr.mxu0 0.0
        %612 = vmatpush1.msra.mxu0 0.0
        %613 = vmatprep.subr.mxu0 0.0
        %614 = vmatpush1.msra.mxu0 0.0
        %615 = vmatprep.subr.mxu0 0.0
        %616 = vmatpush1.msra.mxu0 0.0
        %617 = vmatprep.subr.mxu0 0.0
        %618 = vmatpush1.msra.mxu0 0.0
        %619 = vmatprep.subr.mxu0 0.0
        %620 = vmatpush1.msra.mxu0 0.0
        %621 = vmatprep.subr.mxu0 0.0
        %622 = vmatpush1.msra.mxu0 0.0
        %623 = vmatprep.subr.mxu0 0.0
        %624 = vmatpush1.msra.mxu0 0.0
        %625 = vmatprep.subr.mxu0 0.0
        %626 = vmatpush1.msra.mxu0 0.0
        %627 = vmatprep.subr.mxu0 0.0
        %628 = vmatpush1.msra.mxu0 0.0
        %629 = vmatprep.subr.mxu0 0.0
        %630 = vmatpush1.msra.mxu0 0.0
        %631 = vmatprep.subr.mxu0 0.0
        %632 = vmatpush1.msra.mxu0 0.0
        %633 = vmatprep.subr.mxu0 0.0
        %634 = vmatpush1.msra.mxu0 0.0
        %635 = vmatprep.subr.mxu0 0.0
        %636 = vmatpush1.msra.mxu0 0.0
        %637 = vmatprep.subr.mxu0 0.0
        %638 = vmatpush1.msra.mxu0 0.0
        %639 = vmatprep.subr.mxu0 0.0
        %640 = vmatpush1.msra.mxu0 0.0
        %641 = vmatprep.subr.mxu0 0.0
        %642 = vmatpush1.msra.mxu0 0.0
        %643 = vmatprep.subr.mxu0 0.0
        %644 = vmatpush1.msra.mxu0 0.0
        %645 = vmatprep.subr.mxu0 0.0
        %646 = vmatpush1.msra.mxu0 0.0
        %647 = vmatprep.subr.mxu0 0.0
        %648 = vmatpush1.msra.mxu0 0.0
        %649 = vmatprep.subr.mxu0 0.0
        %650 = vmatpush1.msra.mxu0 0.0
        %651 = vmatprep.mubr.f32.mxu0 0.0
        %652 = vmatmul.mubr.f32.gmra.mrb[0].mxu0 %v564
        %v653 = vpop.f32.mrb[0].mxu0
        %v654 = vadd.f32 0.0, %v653
        %v655 = vpop.f32.mrb[0].mxu0
        %656 = vmatprep.mubr.f32.mxu0 0.0
        %657 = vmatmul.mubr.f32.gmra.mrb[0].mxu0 %v567
        %v658 = vpop.f32.mrb[0].mxu0
        %v659 = vadd.f32 0.0, %v658
        %v660 = vpop.f32.mrb[0].mxu0
        %661 = vmatprep.mubr.f32.mxu0 0.0
        %662 = vmatmul.mubr.f32.gmra.mrb[0].mxu0 %v570
        %v663 = vpop.f32.mrb[0].mxu0
        %v664 = vadd.f32 0.0, %v663
        %v665 = vpop.f32.mrb[0].mxu0
        %666 = vmatprep.mubr.f32.mxu0 0.0
        %667 = vmatmul.mubr.f32.gmra.mrb[0].mxu0 %v573
        %v668 = vpop.f32.mrb[0].mxu0
        %v669 = vadd.f32 0.0, %v668
        %v670 = vpop.f32.mrb[0].mxu0
        %671 = vmatprep.mubr.f32.mxu0 0.0
        %672 = vmatmul.mubr.f32.gmra.mrb[0].mxu0 %v576
        %v673 = vpop.f32.mrb[0].mxu0
        %v674 = vadd.f32 0.0, %v673
        %v675 = vpop.f32.mrb[0].mxu0
        %676 = vmatprep.mubr.f32.mxu0 0.0
        %677 = vmatmul.mubr.f32.gmra.mrb[0].mxu0 %v579
        %v678 = vpop.f32.mrb[0].mxu0
        %v679 = vadd.f32 0.0, %v678
        %v680 = vpop.f32.mrb[0].mxu0
        %681 = vmatprep.mubr.f32.mxu0 0.0
        %682 = vmatmul.mubr.f32.gmra.mrb[0].mxu0 %v582
        %v683 = vpop.f32.mrb[0].mxu0
        %v684 = vadd.f32 0.0, %v683
        %v685 = vpop.f32.mrb[0].mxu0
        %686 = vmatprep.mubr.f32.mxu0 0.0
        %687 = vmatmul.mubr.f32.gmra.mrb[0].mxu0 %v585
        %v688 = vpop.f32.mrb[0].mxu0
        %v689 = vadd.f32 0.0, %v688
        %v690 = vpop.f32.mrb[0].mxu0
        %691 = vdwg.mxu0
        %v692 = vmul.f32 %v654, %v547
        %v693 = vmul.f32 %v659, %v548
        %v694 = vmul.f32 %v664, %v549
        %v695 = vmul.f32 %v669, %v550
        %v696 = vmul.f32 %v674, %v551
        %v697 = vmul.f32 %v679, %v552
        %v698 = vmul.f32 %v684, %v553
        %v699 = vmul.f32 %v689, %v554
        %v700 = vmul.f32 %v467, %v547
        %v701 = vmul.f32 %v468, %v548
        %v702 = vmul.f32 %v469, %v549
        %v703 = vmul.f32 %v470, %v550
        %v704 = vmul.f32 %v471, %v551
        %v705 = vmul.f32 %v472, %v552
        %v706 = vmul.f32 %v473, %v553
        %v707 = vmul.f32 %v474, %v554
        %v708 = vld [vmem:[%s2] sm:$0x1]
        %v710 = vlaneseq
        %v711 = vshrl.u32 %v710, 7
        %v712 = vsub.s32 0, %v711
        %v713 = vrot.slane %v708, %v712
        %v715 = vmul.f32 %v700, %v713
        %v716 = vmul.f32 %v701, %v713
        %v717 = vmul.f32 %v702, %v713
        %v718 = vmul.f32 %v703, %v713
        %v719 = vmul.f32 %v704, %v713
        %v720 = vmul.f32 %v705, %v713
        %v721 = vmul.f32 %v706, %v713
        %v722 = vmul.f32 %v707, %v713
        %v723 = vsub.f32 %v692, %v715
        %v724 = vsub.f32 %v693, %v716
        %v725 = vsub.f32 %v694, %v717
        %v726 = vsub.f32 %v695, %v718
        %v727 = vsub.f32 %v696, %v719
        %v728 = vsub.f32 %v697, %v720
        %v729 = vsub.f32 %v698, %v721
        %v730 = vsub.f32 %v699, %v722
        %v731 = vld [vmem:[%s3] sm:$0x1]
        %v733 = vlaneseq
        %v734 = vshrl.u32 %v733, 7
        %v735 = vsub.s32 0, %v734
        %v736 = vrot.slane %v731, %v735
        %v738 = vadd.f32 %v723, %v736
        %v739 = vadd.f32 %v724, %v736
        %v740 = vadd.f32 %v725, %v736
        %v741 = vadd.f32 %v726, %v736
        %v742 = vadd.f32 %v727, %v736
        %v743 = vadd.f32 %v728, %v736
        %v744 = vadd.f32 %v729, %v736
        %v745 = vadd.f32 %v730, %v736
        %746 = vadd.xlane.f32.xlu0 %v738
        %v747 = vpop.xlane.xlu0 %746
        %748 = vadd.xlane.f32.xlu0 %v739
        %v749 = vpop.xlane.xlu0 %748
        %750 = vadd.xlane.f32.xlu0 %v740
        %v751 = vpop.xlane.xlu0 %750
        %752 = vadd.xlane.f32.xlu0 %v741
        %v753 = vpop.xlane.xlu0 %752
        %754 = vadd.xlane.f32.xlu0 %v742
        %v755 = vpop.xlane.xlu0 %754
        %756 = vadd.xlane.f32.xlu0 %v743
        %v757 = vpop.xlane.xlu0 %756
        %758 = vadd.xlane.f32.xlu0 %v744
        %v759 = vpop.xlane.xlu0 %758
        %760 = vadd.xlane.f32.xlu0 %v745
        %v761 = vpop.xlane.xlu0 %760
        %v762 = vmul.f32 %v747, 0.0078125
        %v763 = vmul.f32 %v749, 0.0078125
        %v764 = vmul.f32 %v751, 0.0078125
        %v765 = vmul.f32 %v753, 0.0078125
        %v766 = vmul.f32 %v755, 0.0078125
        %v767 = vmul.f32 %v757, 0.0078125
        %v768 = vmul.f32 %v759, 0.0078125
        %v769 = vmul.f32 %v761, 0.0078125
        %v770 = vmul.f32 %v738, %v738
        %v771 = vmul.f32 %v739, %v739
        %v772 = vmul.f32 %v740, %v740
        %v773 = vmul.f32 %v741, %v741
        %v774 = vmul.f32 %v742, %v742
        %v775 = vmul.f32 %v743, %v743
        %v776 = vmul.f32 %v744, %v744
        %v777 = vmul.f32 %v745, %v745
        %778 = vadd.xlane.f32.xlu0 %v770
        %v779 = vpop.xlane.xlu0 %778
        %780 = vadd.xlane.f32.xlu0 %v771
        %v781 = vpop.xlane.xlu0 %780
        %782 = vadd.xlane.f32.xlu0 %v772
        %v783 = vpop.xlane.xlu0 %782
        %784 = vadd.xlane.f32.xlu0 %v773
        %v785 = vpop.xlane.xlu0 %784
        %786 = vadd.xlane.f32.xlu0 %v774
        %v787 = vpop.xlane.xlu0 %786
        %788 = vadd.xlane.f32.xlu0 %v775
        %v789 = vpop.xlane.xlu0 %788
        %790 = vadd.xlane.f32.xlu0 %v776
        %v791 = vpop.xlane.xlu0 %790
        %792 = vadd.xlane.f32.xlu0 %v777
        %v793 = vpop.xlane.xlu0 %792
        %v794 = vmul.f32 %v779, 0.0078125
        %v795 = vmul.f32 %v781, 0.0078125
        %v796 = vmul.f32 %v783, 0.0078125
        %v797 = vmul.f32 %v785, 0.0078125
        %v798 = vmul.f32 %v787, 0.0078125
        %v799 = vmul.f32 %v789, 0.0078125
        %v800 = vmul.f32 %v791, 0.0078125
        %v801 = vmul.f32 %v793, 0.0078125
        %v802 = vmul.f32 %v762, %v762
        %v803 = vmul.f32 %v763, %v763
        %v804 = vmul.f32 %v764, %v764
        %v805 = vmul.f32 %v765, %v765
        %v806 = vmul.f32 %v766, %v766
        %v807 = vmul.f32 %v767, %v767
        %v808 = vmul.f32 %v768, %v768
        %v809 = vmul.f32 %v769, %v769
        %v810 = vsub.f32 %v794, %v802
        %v811 = vsub.f32 %v795, %v803
        %v812 = vsub.f32 %v796, %v804
        %v813 = vsub.f32 %v797, %v805
        %v814 = vsub.f32 %v798, %v806
        %v815 = vsub.f32 %v799, %v807
        %v816 = vsub.f32 %v800, %v808
        %v817 = vsub.f32 %v801, %v809
        %v818 = vmax.f32 %v810, 0.0
        %v819 = vmax.f32 %v811, 0.0
        %v820 = vmax.f32 %v812, 0.0
        %v821 = vmax.f32 %v813, 0.0
        %v822 = vmax.f32 %v814, 0.0
        %v823 = vmax.f32 %v815, 0.0
        %v824 = vmax.f32 %v816, 0.0
        %v825 = vmax.f32 %v817, 0.0
        %v826 = vadd.f32 %v818, 1e-05
        %v827 = vadd.f32 %v819, 1e-05
        %v828 = vadd.f32 %v820, 1e-05
        %v829 = vadd.f32 %v821, 1e-05
        %v830 = vadd.f32 %v822, 1e-05
        %v831 = vadd.f32 %v823, 1e-05
        %v832 = vadd.f32 %v824, 1e-05
        %v833 = vadd.f32 %v825, 1e-05
        %v834 = vrsqrt.pop %v826
        %v835 = vrsqrt.pop %v827
        %v836 = vrsqrt.pop %v828
        %v837 = vrsqrt.pop %v829
        %v838 = vrsqrt.pop %v830
        %v839 = vrsqrt.pop %v831
        %v840 = vrsqrt.pop %v832
        %v841 = vrsqrt.pop %v833
        %v842 = vsub.f32 %v738, %v762
        %v843 = vsub.f32 %v739, %v763
        %v844 = vsub.f32 %v740, %v764
        %v845 = vsub.f32 %v741, %v765
        %v846 = vsub.f32 %v742, %v766
        %v847 = vsub.f32 %v743, %v767
        %v848 = vsub.f32 %v744, %v768
        %v849 = vsub.f32 %v745, %v769
        %v850 = vmul.f32 %v842, %v834
        %v851 = vmul.f32 %v843, %v835
        %v852 = vmul.f32 %v844, %v836
        %v853 = vmul.f32 %v845, %v837
        %v854 = vmul.f32 %v846, %v838
        %v855 = vmul.f32 %v847, %v839
        %v856 = vmul.f32 %v848, %v840
        %v857 = vmul.f32 %v849, %v841
        %v858 = vld [vmem:[%s4] sm:$0x1]
        %v860 = vlaneseq
        %v861 = vshrl.u32 %v860, 7
        %v862 = vsub.s32 0, %v861
        %v863 = vrot.slane %v858, %v862
        %v865 = vmul.f32 %v850, %v863
        %v866 = vmul.f32 %v851, %v863
        %v867 = vmul.f32 %v852, %v863
        %v868 = vmul.f32 %v853, %v863
        %v869 = vmul.f32 %v854, %v863
        %v870 = vmul.f32 %v855, %v863
        %v871 = vmul.f32 %v856, %v863
        %v872 = vmul.f32 %v857, %v863
        %v873 = vld [vmem:[%s5] sm:$0x1]
        %v875 = vlaneseq
        %v876 = vshrl.u32 %v875, 7
        %v877 = vsub.s32 0, %v876
        %v878 = vrot.slane %v873, %v877
        %v880 = vadd.f32 %v865, %v878
        %v881 = vadd.f32 %v866, %v878
        %v882 = vadd.f32 %v867, %v878
        %v883 = vadd.f32 %v868, %v878
        %v884 = vadd.f32 %v869, %v878
        %v885 = vadd.f32 %v870, %v878
        %v886 = vadd.f32 %v871, %v878
        %v887 = vadd.f32 %v872, %v878
        %888 = vst [vmem:[%s271] sm:$0xff] %v880
        %889 = vst [vmem:[%s271 + $0x8] sm:$0xff] %v881
        %890 = vst [vmem:[%s271 + $0x10] sm:$0xff] %v882
        %891 = vst [vmem:[%s271 + $0x18] sm:$0xff] %v883
        %892 = vst [vmem:[%s271 + $0x20] sm:$0xff] %v884
        %893 = vst [vmem:[%s271 + $0x28] sm:$0xff] %v885
        %894 = vst [vmem:[%s271 + $0x30] sm:$0xff] %v886
        %895 = vst [vmem:[%s271 + $0x38] sm:$0xff] %v887
        %s896 = sand.u32 %s175, 1
        %s897 = scalar_lea.sflag [#allocation3], %s896
        %s898 = sand.u32 %s175, 1
        %s899 = smul.addr %s898, 64
        %s900 = scalar_lea.vmem [#allocation2], %s899
        // Predicated region
        $region45: #{linear_patch_encoder.1} parent=43 // pred_check
          %p901 = pneg %p185
        $region46: #{linear_patch_encoder.1} parent=43 // pred_check_branch
          %903 = sbr.rel (%p901) target = $region48
        $region47: #{linear_patch_encoder.1} parent=43 // pred_region
          %s904 = smul.u32 8, %s25
          %s906 = ssub.s32 1024, 1024
          %907 = vsyncadd %s897, %s906
          %s908 = smul.addr %s24, 8
          %s909 = sadd.s32 %s904, %s908
          %s910 = smul.addr %s909, 128
          %s911 = scalar_lea.hbm %s6, %s910
          %s912 = sshll.u32 %s900, 4
          %s913 = int_to_ptr.vmem [resolvable:$true] %s912
          %918 = dma.vmem_to_hbm [thread:$0]  %s913, 1024, %s911, %s897, 128, 128, 8
        $region48: #{linear_patch_encoder.1} parent=43 // pred_fallthru
          _
      $region44: #{linear_patch_encoder.1} parent=5 // pred_fallthru
        _
      %p919 = scmp.le.s32.totalorder 2, %s15
      // Predicated region
      $region49: #{linear_patch_encoder.1} parent=5 // pred_check
        %p920 = pneg %p919
      $region50: #{linear_patch_encoder.1} parent=5 // pred_check_branch
        %922 = sbr.rel (%p920) target = $region52
      $region51: #{linear_patch_encoder.1} parent=5 // pred_region
        %s923 = ssub.s32 %s15, 2
        // Predicated region
        $region53: #{linear_patch_encoder.1} parent=51 // pred_check
          %p924 = pneg %p191
        $region54: #{linear_patch_encoder.1} parent=51 // pred_check_branch
          %926 = sbr.rel (%p924) target = $region56
        $region55: #{linear_patch_encoder.1} parent=51 // pred_region
          %s927 = sand.u32 %s176, 1
          %s928 = scalar_lea.sflag [#allocation3], %s927
          %s929 = sand.u32 %s176, 1
          %s930 = smul.addr %s929, 64
          %s931 = scalar_lea.vmem [#allocation2], %s930
          %932 = dma.done %s928, 1024
        $region56: #{linear_patch_encoder.1} parent=51 // pred_fallthru
          _
      $region52: #{linear_patch_encoder.1} parent=5 // pred_fallthru
        _
    $region6: #{linear_patch_encoder.1} parent=1 // loop_footer
      %s19 = sadd.s32 1, %s15
    $region7: #{linear_patch_encoder.1} parent=1 // loop_footer_branch
      %14 = sbr.rel target = $region3
    $region8: #{linear_patch_encoder.1} parent=1 // loop_exit
      _
    %933 = vsyncpa [#allocation3], 1
    %s934 = scalar_lea.sflag [#allocation3], 1
    %935 = vsyncpa %s934, 1

</llo_original>
